<compile_context>
chip_gen: v7x
topology: tpu7x:2x2x1
jax: 0.10.0
libtpu: 0.0.40
codegen_flags: <defaults>
</compile_context>

<pallas_src>
import jax
import jax.numpy as jnp
import numpy as np
from jax.experimental import pallas as pl
from jax.experimental.pallas import tpu as pltpu


def lpvn_kernel(x_hbm, adj_hbm, w1_ref, w2_ref, out_ref,
                x_vmem, adj_vmem, copy_sem):
    i = pl.program_id(0)

    # One-time setup: DMA the grid-invariant X / adj into single-buffered VMEM
    # copies and zero the resident output accumulator.
    @pl.when(i == 0)
    def _():
        cx = pltpu.make_async_copy(x_hbm, x_vmem, copy_sem.at[0])
        ca = pltpu.make_async_copy(adj_hbm, adj_vmem, copy_sem.at[1])
        cx.start()
        ca.start()
        cx.wait()
        ca.wait()
        out_ref[...] = jnp.zeros_like(out_ref)

    x = x_vmem[...]
    adj = adj_vmem[...]
    cdt = x.dtype  # matmul operand dtype (f32 or bf16); accumulation stays f32

    # --- fused a|b encoder ---------------------------------------------------
    # layer 1: relu(adj @ (X @ [Wa1 | Wb1]))            -> [N, 2*H1]
    h = jnp.dot(x, w1_ref[...], preferred_element_type=jnp.float32)
    h = jnp.dot(adj, h.astype(cdt), preferred_element_type=jnp.float32)
    h = jnp.maximum(h, 0.0)

    # layer 2: relu(adj @ (H @ blockdiag(Wa2, Wb2)))    -> [N, 2*H2]
    z = jnp.dot(h.astype(cdt), w2_ref[...], preferred_element_type=jnp.float32)
    z = jnp.dot(adj, z.astype(cdt), preferred_element_type=jnp.float32)
    z = jnp.maximum(z, 0.0)

    # center over nodes (dim 0): z = [a_i | b_i], both centered
    z = z - jnp.mean(z, axis=0, keepdims=True)

    # --- symmetric inner-product decoder -------------------------------------
    # a b^T + b a^T == [a|b] @ [b|a]^T  -> one NT dot_general, no explicit .T
    h2 = z.shape[-1] // 2
    zc = z.astype(cdt)
    swapped = jnp.concatenate([zc[:, h2:], zc[:, :h2]], axis=-1)
    out_ref[...] += jax.lax.dot_general(
        zc, swapped, (((1,), (1,)), ((), ())),
        preferred_element_type=jnp.float32)

    # finalize: in-place sigmoid on the resident output block
    @pl.when(i == pl.num_programs(0) - 1)
    def _():
        out_ref[...] = jax.nn.sigmoid(out_ref[...])


def _vmem_limit_bytes(N, D, H1, H2, itemsize):
    work = (
        2 * N * N * 4                                   # double-buffered f32 output acc
        + N * N * itemsize                              # adj (single VMEM copy)
        + N * D * itemsize                              # X   (single VMEM copy)
        + 2 * (D * 2 * H1 + 4 * H1 * H2) * itemsize     # double-buffered fused weights
        + 4 * N * (2 * H1 + 2 * H2) * 4                 # h/z temporaries headroom
    )
    # floor 32 MiB (internal scratch), cap 64 MiB (portable to v7x)
    return int(min(max(2 * work, 32 * 1024 * 1024), 64 * 1024 * 1024))


def lpvn_forward(x, adj, wa1, wa2, wb1, wb2, *, compute_dtype=jnp.float32):
    """Pallas forward of LPVN.

    x:   [N, D]        adj: [N, N]
    wa1/wb1: [num, D, H1]   wa2/wb2: [num, H1, H2]
    Returns A_pred: [N, N] float32.
    """
    N, D = x.shape
    num, _, H1 = wa1.shape
    H2 = wa2.shape[-1]

    # Fuse the a/b branches at the wrapper level (wider MXU lanes):
    #   layer 1: [Wa1 | Wb1]          -> [num, D, 2*H1]
    #   layer 2: blockdiag(Wa2, Wb2)  -> [num, 2*H1, 2*H2]
    w1 = jnp.concatenate([wa1, wb1], axis=-1)
    zeros = jnp.zeros((num, H1, H2), wa2.dtype)
    w2 = jnp.concatenate(
        [jnp.concatenate([wa2, zeros], axis=-1),
         jnp.concatenate([zeros, wb2], axis=-1)],
        axis=1)

    cdt = compute_dtype
    x_c, adj_c = x.astype(cdt), adj.astype(cdt)
    w1_c, w2_c = w1.astype(cdt), w2.astype(cdt)
    itemsize = jnp.dtype(cdt).itemsize

    return pl.pallas_call(
        lpvn_kernel,
        out_shape=jax.ShapeDtypeStruct((N, N), jnp.float32),
        grid_spec=pltpu.PrefetchScalarGridSpec(
            num_scalar_prefetch=0,
            grid=(num,),
            in_specs=[
                pl.BlockSpec(memory_space=pl.ANY),   # X   (HBM; copied to VMEM once)
                pl.BlockSpec(memory_space=pl.ANY),   # adj (HBM; copied to VMEM once)
                pl.BlockSpec((pl.Squeezed(), D, 2 * H1), lambda i: (i, 0, 0)),
                pl.BlockSpec((pl.Squeezed(), 2 * H1, 2 * H2), lambda i: (i, 0, 0)),
            ],
            out_specs=pl.BlockSpec((N, N), lambda i: (0, 0)),
            scratch_shapes=[
                pltpu.VMEM((N, D), cdt),        # resident X copy
                pltpu.VMEM((N, N), cdt),        # resident adj copy (single-buffered)
                pltpu.SemaphoreType.DMA((2,)),  # one sem per one-time copy
            ],
        ),
        compiler_params=pltpu.CompilerParams(
            dimension_semantics=("arbitrary",),
            vmem_limit_bytes=_vmem_limit_bytes(N, D, H1, H2, itemsize),
        ),
    )(x_c, adj_c, w1_c, w2_c)


def glorot_init(key, input_dim, output_dim):
    init_range = np.sqrt(6.0 / (input_dim + output_dim))
    return jax.random.uniform(key, (input_dim, output_dim),
                              dtype=jnp.float32,
                              minval=-init_range, maxval=init_range)


def lpvn_reference(x, adj, wa1, wa2, wb1, wb2):
    """Pure-JAX reference matching the PyTorch forward."""
    num = wa1.shape[0]
    N = x.shape[0]
    A_pred = jnp.zeros((N, N), jnp.float32)
    for i in range(num):
        def branch(w1, w2):
            h = jax.nn.relu(adj @ (x @ w1))
            z = jax.nn.relu(adj @ (h @ w2))
            return z - z.mean(axis=0, keepdims=True)
        a = branch(wa1[i], wa2[i])
        b = branch(wb1[i], wb2[i])
        A_pred = A_pred + a @ b.T + b @ a.T
    return jax.nn.sigmoid(A_pred)


if __name__ == "__main__":
    # Small shapes consistent with the module: N nodes, input/hidden dims, num branches.
    N = 16
    INPUT_DIM = 8
    HIDDEN1 = 32
    HIDDEN2 = 16
    NUM = 2

    key = jax.random.PRNGKey(0)
    keys = jax.random.split(key, 2 + 4 * NUM)

    x = jax.random.normal(keys[0], (N, INPUT_DIM), dtype=jnp.float32)
    # symmetric normalized-ish dense "adjacency"
    adj_raw = jax.random.uniform(keys[1], (N, N), dtype=jnp.float32)
    adj = (adj_raw + adj_raw.T) / (2.0 * N)

    wa1 = jnp.stack([glorot_init(keys[2 + 4 * i + 0], INPUT_DIM, HIDDEN1) for i in range(NUM)])
    wa2 = jnp.stack([glorot_init(keys[2 + 4 * i + 1], HIDDEN1, HIDDEN2) for i in range(NUM)])
    wb1 = jnp.stack([glorot_init(keys[2 + 4 * i + 2], INPUT_DIM, HIDDEN1) for i in range(NUM)])
    wb2 = jnp.stack([glorot_init(keys[2 + 4 * i + 3], HIDDEN1, HIDDEN2) for i in range(NUM)])

    ref = lpvn_reference(x, adj, wa1, wa2, wb1, wb2)

    # f32 matmul path: strict check against the reference.
    out_f32 = jax.block_until_ready(
        lpvn_forward(x, adj, wa1, wa2, wb1, wb2, compute_dtype=jnp.float32))
    np.testing.assert_allclose(np.asarray(out_f32), np.asarray(ref),
                               rtol=1e-5, atol=1e-5)

    # bf16 matmul path (f32 accumulation): loose check (sigmoid output in [0,1]).
    out_bf16 = jax.block_until_ready(
        lpvn_forward(x, adj, wa1, wa2, wb1, wb2, compute_dtype=jnp.bfloat16))
    np.testing.assert_allclose(np.asarray(out_bf16), np.asarray(ref),
                               rtol=0, atol=5e-2)

    print("KERNEL_OK")
</pallas_src>

<mosaic_0001>
module attributes {stable_mosaic.version = 11 : i64} {
  func.func @lpvn_kernel(%arg0: i32, %arg1: memref<16x8xf32, #tpu.memory_space<any>>, %arg2: memref<16x16xf32, #tpu.memory_space<any>>, %arg3: memref<1x8x64xf32, #tpu.memory_space<vmem>>, %arg4: memref<1x64x32xf32, #tpu.memory_space<vmem>>, %arg5: memref<16x16xf32, #tpu.memory_space<vmem>>, %arg6: memref<16x8xf32, #tpu.memory_space<vmem>>, %arg7: memref<16x16xf32, #tpu.memory_space<vmem>>, %arg8: memref<2x!tpu.dma_semaphore, #tpu.memory_space<semaphore_mem>>) attributes {dimension_semantics = [#tpu.dimension_semantics<arbitrary>], iteration_bounds = array<i64: 2>, scalar_prefetch = 0 : i64, scratch_operands = 3 : i64, tpu.core_type = #tpu.core_type<tc>, window_params = [{}, {}, {transform_indices = @transform_2, window_bounds = array<i64: 1, 8, 64>}, {transform_indices = @transform_3, window_bounds = array<i64: 1, 64, 32>}, {pipeline_mode = #tpu.pipeline_mode<synchronous>, transform_indices = @transform_4, window_bounds = array<i64: 16, 16>}]} {
    %c0_i32 = arith.constant 0 : i32
    %0 = arith.cmpi eq, %arg0, %c0_i32 : i32
    %1 = arith.extui %0 : i1 to i32
    %c0_i32_0 = arith.constant 0 : i32
    %2 = arith.cmpi ne, %1, %c0_i32_0 : i32
    scf.if %2 {
      %c0_i32_23 = arith.constant 0 : i32
      %33 = tpu.memref_slice %arg8[%c0_i32_23] : memref<2x!tpu.dma_semaphore, #tpu.memory_space<semaphore_mem>> -> memref<1x!tpu.dma_semaphore, #tpu.memory_space<semaphore_mem>>
      %34 = tpu.memref_squeeze %33 : memref<1x!tpu.dma_semaphore, #tpu.memory_space<semaphore_mem>> -> memref<!tpu.dma_semaphore, #tpu.memory_space<semaphore_mem>>
      tpu.enqueue_dma source(%arg1 : memref<16x8xf32, #tpu.memory_space<any>>) target(%arg6 : memref<16x8xf32, #tpu.memory_space<vmem>>) target_semaphore(%34 : memref<!tpu.dma_semaphore, #tpu.memory_space<semaphore_mem>>)
      %c1_i32_24 = arith.constant 1 : i32
      %35 = tpu.memref_slice %arg8[%c1_i32_24] : memref<2x!tpu.dma_semaphore, #tpu.memory_space<semaphore_mem>> -> memref<1x!tpu.dma_semaphore, #tpu.memory_space<semaphore_mem>>
      %36 = tpu.memref_squeeze %35 : memref<1x!tpu.dma_semaphore, #tpu.memory_space<semaphore_mem>> -> memref<!tpu.dma_semaphore, #tpu.memory_space<semaphore_mem>>
      tpu.enqueue_dma source(%arg2 : memref<16x16xf32, #tpu.memory_space<any>>) target(%arg7 : memref<16x16xf32, #tpu.memory_space<vmem>>) target_semaphore(%36 : memref<!tpu.dma_semaphore, #tpu.memory_space<semaphore_mem>>)
      %c0_i32_25 = arith.constant 0 : i32
      %37 = tpu.memref_slice %arg8[%c0_i32_25] : memref<2x!tpu.dma_semaphore, #tpu.memory_space<semaphore_mem>> -> memref<1x!tpu.dma_semaphore, #tpu.memory_space<semaphore_mem>>
      %38 = tpu.memref_squeeze %37 : memref<1x!tpu.dma_semaphore, #tpu.memory_space<semaphore_mem>> -> memref<!tpu.dma_semaphore, #tpu.memory_space<semaphore_mem>>
      tpu.wait_dma2 semaphore(%38 : memref<!tpu.dma_semaphore, #tpu.memory_space<semaphore_mem>>) src(%arg1 : memref<16x8xf32, #tpu.memory_space<any>>) dst(%arg6 : memref<16x8xf32, #tpu.memory_space<vmem>>)
      %c1_i32_26 = arith.constant 1 : i32
      %39 = tpu.memref_slice %arg8[%c1_i32_26] : memref<2x!tpu.dma_semaphore, #tpu.memory_space<semaphore_mem>> -> memref<1x!tpu.dma_semaphore, #tpu.memory_space<semaphore_mem>>
      %40 = tpu.memref_squeeze %39 : memref<1x!tpu.dma_semaphore, #tpu.memory_space<semaphore_mem>> -> memref<!tpu.dma_semaphore, #tpu.memory_space<semaphore_mem>>
      tpu.wait_dma2 semaphore(%40 : memref<!tpu.dma_semaphore, #tpu.memory_space<semaphore_mem>>) src(%arg2 : memref<16x16xf32, #tpu.memory_space<any>>) dst(%arg7 : memref<16x16xf32, #tpu.memory_space<vmem>>)
      %cst_27 = arith.constant 0.000000e+00 : f32
      %41 = vector.broadcast %cst_27 : f32 to vector<16x16xf32>
      %c0_28 = arith.constant 0 : index
      %c0_29 = arith.constant 0 : index
      %42 = vector.load %arg5[%c0_28, %c0_29] : memref<16x16xf32, #tpu.memory_space<vmem>>, vector<16x16xf32>
      tpu.vector_store %arg5[%c0_28, %c0_29], %41 {strides = array<i32>} : memref<16x16xf32, #tpu.memory_space<vmem>>, vector<16x16xf32>,
    } else {
    }
    %c0 = arith.constant 0 : index
    %c0_1 = arith.constant 0 : index
    %3 = vector.load %arg6[%c0, %c0_1] : memref<16x8xf32, #tpu.memory_space<vmem>>, vector<16x8xf32>
    %c0_2 = arith.constant 0 : index
    %c0_3 = arith.constant 0 : index
    %4 = vector.load %arg7[%c0_2, %c0_3] : memref<16x16xf32, #tpu.memory_space<vmem>>, vector<16x16xf32>
    %c0_4 = arith.constant 0 : index
    %c0_5 = arith.constant 0 : index
    %c0_6 = arith.constant 0 : index
    %5 = vector.load %arg3[%c0_4, %c0_5, %c0_6] : memref<1x8x64xf32, #tpu.memory_space<vmem>>, vector<1x8x64xf32>
    %6 = vector.shape_cast %5 : vector<1x8x64xf32> to vector<8x64xf32>
    %cst = arith.constant dense<0.000000e+00> : vector<16x64xf32>
    %7 = tpu.matmul %3, %6, %cst {dimension_numbers = #tpu.dot_dimension_numbers<[1], [0], [0], [1], [0, 0, 1, 1], [], []>} : vector<16x8xf32>, vector<8x64xf32>, vector<16x64xf32> -> vector<16x64xf32>
    %cst_7 = arith.constant dense<0.000000e+00> : vector<16x64xf32>
    %8 = tpu.matmul %4, %7, %cst_7 {dimension_numbers = #tpu.dot_dimension_numbers<[1], [0], [0], [1], [0, 0, 1, 1], [], []>} : vector<16x16xf32>, vector<16x64xf32>, vector<16x64xf32> -> vector<16x64xf32>
    %cst_8 = arith.constant 0.000000e+00 : f32
    %9 = vector.broadcast %cst_8 : f32 to vector<16x64xf32>
    %10 = arith.maximumf %8, %9 : vector<16x64xf32>
    %c0_9 = arith.constant 0 : index
    %c0_10 = arith.constant 0 : index
    %c0_11 = arith.constant 0 : index
    %11 = vector.load %arg4[%c0_9, %c0_10, %c0_11] : memref<1x64x32xf32, #tpu.memory_space<vmem>>, vector<1x64x32xf32>
    %12 = vector.shape_cast %11 : vector<1x64x32xf32> to vector<64x32xf32>
    %cst_12 = arith.constant dense<0.000000e+00> : vector<16x32xf32>
    %13 = tpu.matmul %10, %12, %cst_12 {dimension_numbers = #tpu.dot_dimension_numbers<[1], [0], [0], [1], [0, 0, 1, 1], [], []>} : vector<16x64xf32>, vector<64x32xf32>, vector<16x32xf32> -> vector<16x32xf32>
    %cst_13 = arith.constant dense<0.000000e+00> : vector<16x32xf32>
    %14 = tpu.matmul %4, %13, %cst_13 {dimension_numbers = #tpu.dot_dimension_numbers<[1], [0], [0], [1], [0, 0, 1, 1], [], []>} : vector<16x16xf32>, vector<16x32xf32>, vector<16x32xf32> -> vector<16x32xf32>
    %cst_14 = arith.constant 0.000000e+00 : f32
    %15 = vector.broadcast %cst_14 : f32 to vector<16x32xf32>
    %16 = arith.maximumf %14, %15 : vector<16x32xf32>
    %cst_15 = arith.constant dense<0.000000e+00> : vector<32xf32>
    %17 = vector.multi_reduction <add>, %16, %cst_15 [0] : vector<16x32xf32> to vector<32xf32>
    %18 = vector.shape_cast %17 : vector<32xf32> to vector<1x32xf32>
    %cst_16 = arith.constant 1.600000e+01 : f32
    %19 = vector.broadcast %cst_16 : f32 to vector<1x32xf32>
    %20 = arith.divf %18, %19 : vector<1x32xf32>
    %21 = vector.broadcast %20 : vector<1x32xf32> to vector<16x32xf32>
    %22 = arith.subf %16, %21 : vector<16x32xf32>
    %23 = vector.extract_strided_slice %22 {offsets = [0, 16], sizes = [16, 16], strides = [1, 1]} : vector<16x32xf32> to vector<16x16xf32>
    %24 = vector.extract_strided_slice %22 {offsets = [0, 0], sizes = [16, 16], strides = [1, 1]} : vector<16x32xf32> to vector<16x16xf32>
    %25 = tpu.concatenate %23, %24 in 1 : vector<16x16xf32>, vector<16x16xf32> -> vector<16x32xf32>
    %c0_17 = arith.constant 0 : index
    %c0_18 = arith.constant 0 : index
    %26 = vector.load %arg5[%c0_17, %c0_18] : memref<16x16xf32, #tpu.memory_space<vmem>>, vector<16x16xf32>
    %cst_19 = arith.constant dense<0.000000e+00> : vector<16x16xf32>
    %27 = tpu.matmul %22, %25, %cst_19 {dimension_numbers = #tpu.dot_dimension_numbers<[1], [1], [0], [0], [0, 0, 1, 0], [], []>} : vector<16x32xf32>, vector<16x32xf32>, vector<16x16xf32> -> vector<16x16xf32>
    %28 = arith.addf %26, %27 : vector<16x16xf32>
    %c0_20 = arith.constant 0 : index
    %c0_21 = arith.constant 0 : index
    %29 = vector.load %arg5[%c0_20, %c0_21] : memref<16x16xf32, #tpu.memory_space<vmem>>, vector<16x16xf32>
    tpu.vector_store %arg5[%c0_20, %c0_21], %28 {strides = array<i32>} : memref<16x16xf32, #tpu.memory_space<vmem>>, vector<16x16xf32>,
    %c1_i32 = arith.constant 1 : i32
    %30 = arith.cmpi eq, %arg0, %c1_i32 : i32
    %31 = arith.extui %30 : i1 to i32
    %c0_i32_22 = arith.constant 0 : i32
    %32 = arith.cmpi ne, %31, %c0_i32_22 : i32
    scf.if %32 {
      %c0_23 = arith.constant 0 : index
      %c0_24 = arith.constant 0 : index
      %33 = vector.load %arg5[%c0_23, %c0_24] : memref<16x16xf32, #tpu.memory_space<vmem>>, vector<16x16xf32>
      %34 = arith.negf %33 : vector<16x16xf32>
      %35 = math.exp %34 : vector<16x16xf32>
      %cst_25 = arith.constant 1.000000e+00 : f32
      %36 = vector.broadcast %cst_25 : f32 to vector<16x16xf32>
      %37 = arith.addf %36, %35 : vector<16x16xf32>
      %38 = arith.divf %36, %37 : vector<16x16xf32>
      %c0_26 = arith.constant 0 : index
      %c0_27 = arith.constant 0 : index
      %39 = vector.load %arg5[%c0_26, %c0_27] : memref<16x16xf32, #tpu.memory_space<vmem>>, vector<16x16xf32>
      tpu.vector_store %arg5[%c0_26, %c0_27], %38 {strides = array<i32>} : memref<16x16xf32, #tpu.memory_space<vmem>>, vector<16x16xf32>,
    } else {
    }
    return
  }
  func.func @transform_2(%arg0: i32) -> (i32, i32, i32) {
    %c0_i32 = arith.constant 0 : i32
    %c0_i32_0 = arith.constant 0 : i32
    %c0_i32_1 = arith.constant 0 : i32
    return %arg0, %c0_i32, %c0_i32_0 : i32, i32, i32
  }
  func.func @transform_3(%arg0: i32) -> (i32, i32, i32) {
    %c0_i32 = arith.constant 0 : i32
    %c0_i32_0 = arith.constant 0 : i32
    %c0_i32_1 = arith.constant 0 : i32
    return %arg0, %c0_i32, %c0_i32_0 : i32, i32, i32
  }
  func.func @transform_4(%arg0: i32) -> (i32, i32) {
    %c0_i32 = arith.constant 0 : i32
    %c0_i32_0 = arith.constant 0 : i32
    %c0_i32_1 = arith.constant 0 : i32
    return %c0_i32, %c0_i32_0 : i32, i32
  }
}

</mosaic_0001>

<llo_original>
// kernel: tpu_custom_call.1
$region0: #{tpu_custom_call.1}
  #allocation0 [shape = 'u32[]', space=smem, size = 0x4, offset = 0x4, fixed_abs, tag = 'smem constant byte address 0x4 - core index']
  #allocation1 [shape = 'u32[144,128]{1,0:T(1,128)}', space=vmem, size = 0x12000, scoped, tag = 'internal scratch']
  #allocation2 [shape = 'f32[16,8]{1,0:T(8,128)}', space=vmem, size = 0x2000, scoped, tag = 'scratch operand']
  #allocation3 [shape = 'f32[16,16]{1,0:T(8,128)}', space=vmem, size = 0x2000, scoped, tag = 'scratch operand']
  #allocation4 [shape = 's32[2]{0}', space=sflag, size = 0x8, scoped, tag = 'scratch operand']
  #allocation7 [shape = 's32[]', space=sflag, size = 0x4, offset = 0, fixed_abs, tag = 'sflag constant byte address 0x0 - dummy sync flag']
  #allocation8 [shape = 's32[]', space=sflag, size = 0x4, offset = 0, fixed_abs, tag = 'sflag constant byte address 0x0 - dummy sync flag']
  %s0 = inlined_call_operand.vmem [shape: f32[16,8], index: 0, kind: input, shape index: {}]
  %s1 = inlined_call_operand.vmem [shape: f32[16,16], index: 1, kind: input, shape index: {}]
  %s2 = inlined_call_operand.vmem [shape: f32[2,8,64], index: 2, kind: input, shape index: {}]
  %s3 = inlined_call_operand.vmem [shape: f32[2,64,32], index: 3, kind: input, shape index: {}]
  %s4 = inlined_call_operand.hbm [shape: f32[16,16], index: 4, kind: output, shape index: {}]
  %s5 = sld [smem:[#allocation0]]
  $region117: #{tpu_custom_call.1} parent=0
    _
  %s7 = ssub.s32 1, %s5
  %s8 = scalar_select 0, %s7, %s5
  $region1: #{tpu_custom_call.1} parent=0
    #allocation5 [shape = 'u8[8192]{0}', space=vmem, size = 0x2000, scoped, tag = 'output window, operand 0, single buffered']
    #allocation6 [shape = 's32[2]{0}', space=sflag, size = 0x8, scoped, tag = 'scoped memory for tpu_custom_call.1']
    %9 = vsyncpa [#allocation6], 0
    loop: start=0, step=1, limit=4
    $region2: #{tpu_custom_call.1} parent=1 // loop_pre_header
      _
    $region3: #{tpu_custom_call.1} parent=1 // loop_header
      %s11 = sphi 0, %s15
      %p12 = scmp.ge.s32.totalorder %s11, 4
      %s21 = sphi 0, %s23
      %s24 = sphi 0, %s21
      %s25 = sphi 0, %s24
      %s41 = sphi 0, %s25
      %s47 = sphi 0, %s49
      %s50 = sphi 0, %s47
      %s51 = sphi 0, %s50
      %s67 = sphi 0, %s51
      %s71 = sphi 0, %s71
      %s73 = sphi 0, %s71
      %s74 = sphi 0, %s73
      %s88 = sphi 0, %s74
    $region4: #{tpu_custom_call.1} parent=1 // loop_header_branch
      %14 = sbr.rel (%p12) target = $region8
    $region5: #{tpu_custom_call.1} parent=1 // loop_body
      %s16 = ssub.s32 %s11, 1
      %s17 = ssub.s32 %s11, 2
      %s18 = sadd.s32 %s11, 1
      %s19 = ssub.s32 %s11, %s18
      %p20 = scmp.eq.s32.totalorder %s19, 0
      %s22 = sadd.s32 %s21, 1
      %s23 = scalar_select %p20, %s21, %s22
      %p26 = pneg %p20
      %p27 = scmp.eq.s32.totalorder %s11, 1
      %p28 = por %p26, %p27
      %p29 = scmp.ne.s32.totalorder %s21, %s24
      %p30 = scmp.eq.s32.totalorder %s11, 0
      %p31 = por %p29, %p30
      %p32 = scmp.ne.s32.totalorder %s21, %s24
      %p33 = scmp.eq.s32.totalorder %s16, 1
      %p34 = por %p32, %p33
      %p35 = scmp.ne.s32.totalorder %s24, %s25
      %p36 = scmp.eq.s32.totalorder %s16, 0
      %p37 = por %p35, %p36
      %p38 = scmp.ne.s32.totalorder %s24, %s25
      %p39 = scmp.eq.s32.totalorder %s17, 1
      %p40 = por %p38, %p39
      %p42 = scmp.ne.s32.totalorder %s25, %s41
      %p43 = scmp.eq.s32.totalorder %s17, 0
      %p44 = por %p42, %p43
      %s45 = ssub.s32 %s11, %s18
      %p46 = scmp.eq.s32.totalorder %s45, 0
      %s48 = sadd.s32 %s47, 1
      %s49 = scalar_select %p46, %s47, %s48
      %p52 = pneg %p46
      %p53 = scmp.eq.s32.totalorder %s11, 1
      %p54 = por %p52, %p53
      %p55 = scmp.ne.s32.totalorder %s47, %s50
      %p56 = scmp.eq.s32.totalorder %s11, 0
      %p57 = por %p55, %p56
      %p58 = scmp.ne.s32.totalorder %s47, %s50
      %p59 = scmp.eq.s32.totalorder %s16, 1
      %p60 = por %p58, %p59
      %p61 = scmp.ne.s32.totalorder %s50, %s51
      %p62 = scmp.eq.s32.totalorder %s16, 0
      %p63 = por %p61, %p62
      %p64 = scmp.ne.s32.totalorder %s50, %s51
      %p65 = scmp.eq.s32.totalorder %s17, 1
      %p66 = por %p64, %p65
      %p68 = scmp.ne.s32.totalorder %s51, %s67
      %p69 = scmp.eq.s32.totalorder %s17, 0
      %p70 = por %p68, %p69
      %s72 = sadd.s32 %s71, 1
      %p75 = scmp.eq.s32.totalorder %s11, 1
      %p76 = scmp.ne.s32.totalorder %s71, %s73
      %p77 = scmp.eq.s32.totalorder %s11, 0
      %p78 = por %p76, %p77
      %p79 = scmp.ne.s32.totalorder %s71, %s73
      %p80 = scmp.eq.s32.totalorder %s16, 1
      %p81 = por %p79, %p80
      %p82 = scmp.ne.s32.totalorder %s73, %s74
      %p83 = scmp.eq.s32.totalorder %s16, 0
      %p84 = por %p82, %p83
      %p85 = scmp.ne.s32.totalorder %s73, %s74
      %p86 = scmp.eq.s32.totalorder %s17, 1
      %p87 = por %p85, %p86
      %p89 = scmp.ne.s32.totalorder %s74, %s88
      %p90 = scmp.eq.s32.totalorder %s17, 0
      %p91 = por %p89, %p90
      %p92 = scmp.le.s32.totalorder 1, %s11
      %p93 = scmp.lt.s32.totalorder %s11, 3
      %p94 = pnand %p92, %p93
      %p95 = pneg %p94
      // Predicated region
      $region9: #{tpu_custom_call.1} parent=5 // pred_check
        _
      $region10: #{tpu_custom_call.1} parent=5 // pred_check_branch
        %97 = sbr.rel (%p94) target = $region12
      $region11: #{tpu_custom_call.1} parent=5 // pred_region
        %s98 = ssub.s32 %s11, 1
      $region12: #{tpu_custom_call.1} parent=5 // pred_fallthru
        _
      %p99 = scmp.lt.s32.totalorder %s11, 2
      // Predicated region
      $region13: #{tpu_custom_call.1} parent=5 // pred_check
        %p100 = pneg %p99
      $region14: #{tpu_custom_call.1} parent=5 // pred_check_branch
        %102 = sbr.rel (%p100) target = $region16
      $region15: #{tpu_custom_call.1} parent=5 // pred_region
        // Predicated region
        $region17: #{tpu_custom_call.1} parent=15 // pred_check
          %p103 = pneg %p31
        $region18: #{tpu_custom_call.1} parent=15 // pred_check_branch
          %105 = sbr.rel (%p103) target = $region20
        $region19: #{tpu_custom_call.1} parent=15 // pred_region
          %p106 = scmp.lt.s32.totalorder %s11, 1
          %s107 = scalar_select %p106, %s11, 1
          %s108 = smul.addr %s107, 8
          %s109 = scalar_lea.vmem %s2, %s108
        $region20: #{tpu_custom_call.1} parent=15 // pred_fallthru
          _
        // Predicated region
        $region21: #{tpu_custom_call.1} parent=15 // pred_check
          %p110 = pneg %p57
        $region22: #{tpu_custom_call.1} parent=15 // pred_check_branch
          %112 = sbr.rel (%p110) target = $region24
        $region23: #{tpu_custom_call.1} parent=15 // pred_region
          %p113 = scmp.lt.s32.totalorder %s11, 1
          %s114 = scalar_select %p113, %s11, 1
          %s115 = smul.addr %s114, 8
          %s116 = smul.addr %s115, 8
          %s117 = scalar_lea.vmem %s3, %s116
        $region24: #{tpu_custom_call.1} parent=15 // pred_fallthru
          _
      $region16: #{tpu_custom_call.1} parent=5 // pred_fallthru
        _
      %p118 = scmp.le.s32.totalorder 1, %s11
      %p119 = scmp.lt.s32.totalorder %s11, 3
      %p120 = pnand %p118, %p119
      %p121 = pneg %p120
      // Predicated region
      $region25: #{tpu_custom_call.1} parent=5 // pred_check
        _
      $region26: #{tpu_custom_call.1} parent=5 // pred_check_branch
        %123 = sbr.rel (%p120) target = $region28
      $region27: #{tpu_custom_call.1} parent=5 // pred_region
        %s124 = ssub.s32 %s11, 1
        %p125 = scmp.lt.s32.totalorder %s16, 1
        %s126 = scalar_select %p125, %s16, 1
        %s127 = smul.addr %s126, 8
        %s128 = scalar_lea.vmem %s2, %s127
        %p129 = pneg %p37
        %p130 = pneg %p34
        %p131 = scmp.lt.s32.totalorder %s16, 1
        %s132 = scalar_select %p131, %s16, 1
        %s133 = smul.addr %s132, 8
        %s134 = smul.addr %s133, 8
        %s135 = scalar_lea.vmem %s3, %s134
        %p136 = pneg %p63
        %p137 = pneg %p60
        %p138 = pneg %p84
        %p139 = pneg %p81
        %p140 = scmp.lt.s32.totalorder %s16, 1
        %s141 = scalar_select %p140, %s16, 1
        %s142 = smul.addr %s141, 8
        %s143 = scalar_lea.vmem %s2, %s142
        %p144 = scmp.lt.s32.totalorder %s16, 1
        %s145 = scalar_select %p144, %s16, 1
        %s146 = smul.addr %s145, 8
        %s147 = smul.addr %s146, 8
        %s148 = scalar_lea.vmem %s3, %s147
        %p149 = scmp.eq.s32.totalorder %s16, 0
        // Predicated region
        $region29: #{tpu_custom_call.1} parent=27 // pred_check
          %p150 = pneg %p149
        $region30: #{tpu_custom_call.1} parent=27 // pred_check_branch
          %152 = sbr.rel (%p150) target = $region32
        $region31: #{tpu_custom_call.1} parent=27 // pred_region
          %p154 = scmp.lt.u32.totalorder 16, 8
          %p155 = pneg %p154
          // Predicated region
          $region33: #{tpu_custom_call.1} parent=31 // pred_check
            _
          $region34: #{tpu_custom_call.1} parent=31 // pred_check_branch
            %157 = sbr.rel (%p154) target = $region36
          $region35: #{tpu_custom_call.1} parent=31 // pred_region
            %s172 = sand.u32 16, 7
            %p173 = scmp.eq.s32.totalorder %s172, 0
            // Predicated region
            $region48: #{tpu_custom_call.1} parent=35 // pred_check
              %p174 = pneg %p173
            $region49: #{tpu_custom_call.1} parent=35 // pred_check_branch
              %176 = sbr.rel (%p174) target = $region51
            $region50: #{tpu_custom_call.1} parent=35 // pred_region
              loop: start=0, step=1, limit=1
              $region52: #{tpu_custom_call.1} parent=50 // loop_pre_header
                _
              $region53: #{tpu_custom_call.1} parent=50 // loop_header
                %s178 = sphi 0, %s182
                %p179 = scmp.ge.s32.totalorder %s178, 1
                %s183 = sphi %s0, %s0
                %s184 = sphi [#allocation2], [#allocation2]
              $region54: #{tpu_custom_call.1} parent=50 // loop_header_branch
                %181 = sbr.rel (%p179) target = $region58
              $region55: #{tpu_custom_call.1} parent=50 // loop_body
                %v185 = vld [vmem:[%s183] sm:$0xff]
                %186 = vst [vmem:[%s184] sm:$0xff] %v185
                %v187 = vld [vmem:[%s183 + $0x8] sm:$0xff]
                %188 = vst [vmem:[%s184 + $0x8] sm:$0xff] %v187
              $region56: #{tpu_custom_call.1} parent=50 // loop_footer
                %s182 = sadd.s32 1, %s178
              $region57: #{tpu_custom_call.1} parent=50 // loop_footer_branch
                %177 = sbr.rel target = $region53
              $region58: #{tpu_custom_call.1} parent=50 // loop_exit
                _
            $region51: #{tpu_custom_call.1} parent=35 // pred_fallthru
              _
            %p189 = pneg %p173
            // Predicated region
            $region59: #{tpu_custom_call.1} parent=35 // pred_check
              _
            $region60: #{tpu_custom_call.1} parent=35 // pred_check_branch
              %191 = sbr.rel (%p173) target = $region62
            $region61: #{tpu_custom_call.1} parent=35 // pred_region
              %s192 = sand.u32 16, 7
            $region62: #{tpu_custom_call.1} parent=35 // pred_fallthru
              _
          $region36: #{tpu_custom_call.1} parent=31 // pred_fallthru
            _
          // Predicated region
          $region37: #{tpu_custom_call.1} parent=31 // pred_check
            %p158 = pneg %p154
          $region38: #{tpu_custom_call.1} parent=31 // pred_check_branch
            %160 = sbr.rel (%p158) target = $region40
          $region39: #{tpu_custom_call.1} parent=31 // pred_region
            %s161 = sshllo.u32 0, 16
            loop: start=0, step=1, limit=1
            $region41: #{tpu_custom_call.1} parent=39 // loop_pre_header
              _
            $region42: #{tpu_custom_call.1} parent=39 // loop_header
              %s163 = sphi 0, %s167
              %p164 = scmp.ge.s32.totalorder %s163, 1
              %s168 = sphi %s0, %s0
              %s169 = sphi [#allocation2], [#allocation2]
            $region43: #{tpu_custom_call.1} parent=39 // loop_header_branch
              %166 = sbr.rel (%p164) target = $region47
            $region44: #{tpu_custom_call.1} parent=39 // loop_body
              %v170 = vld [vmem:[%s168] sm:%s161]
              %171 = vst [vmem:[%s169] sm:%s161] %v170
            $region45: #{tpu_custom_call.1} parent=39 // loop_footer
              %s167 = sadd.s32 1, %s163
            $region46: #{tpu_custom_call.1} parent=39 // loop_footer_branch
              %162 = sbr.rel target = $region42
            $region47: #{tpu_custom_call.1} parent=39 // loop_exit
              _
          $region40: #{tpu_custom_call.1} parent=31 // pred_fallthru
            _
          // Predicated region
          $region63: #{tpu_custom_call.1} parent=31 // pred_check
            _
          $region64: #{tpu_custom_call.1} parent=31 // pred_check_branch
            %195 = sbr.rel (0) target = $region66
          $region65: #{tpu_custom_call.1} parent=31 // pred_region
            %196 = vsyncadd [#allocation4], 256
          $region66: #{tpu_custom_call.1} parent=31 // pred_fallthru
            _
          %s197 = scalar_lea.sflag [#allocation4], 1
          %p199 = scmp.lt.u32.totalorder 16, 8
          %p200 = pneg %p199
          // Predicated region
          $region67: #{tpu_custom_call.1} parent=31 // pred_check
            _
          $region68: #{tpu_custom_call.1} parent=31 // pred_check_branch
            %202 = sbr.rel (%p199) target = $region70
          $region69: #{tpu_custom_call.1} parent=31 // pred_region
            %s217 = sand.u32 16, 7
            %p218 = scmp.eq.s32.totalorder %s217, 0
            // Predicated region
            $region82: #{tpu_custom_call.1} parent=69 // pred_check
              %p219 = pneg %p218
            $region83: #{tpu_custom_call.1} parent=69 // pred_check_branch
              %221 = sbr.rel (%p219) target = $region85
            $region84: #{tpu_custom_call.1} parent=69 // pred_region
              loop: start=0, step=1, limit=1
              $region86: #{tpu_custom_call.1} parent=84 // loop_pre_header
                _
              $region87: #{tpu_custom_call.1} parent=84 // loop_header
                %s223 = sphi 0, %s227
                %p224 = scmp.ge.s32.totalorder %s223, 1
                %s228 = sphi %s1, %s1
                %s229 = sphi [#allocation3], [#allocation3]
              $region88: #{tpu_custom_call.1} parent=84 // loop_header_branch
                %226 = sbr.rel (%p224) target = $region92
              $region89: #{tpu_custom_call.1} parent=84 // loop_body
                %v230 = vld [vmem:[%s228] sm:$0xff]
                %231 = vst [vmem:[%s229] sm:$0xff] %v230
                %v232 = vld [vmem:[%s228 + $0x8] sm:$0xff]
                %233 = vst [vmem:[%s229 + $0x8] sm:$0xff] %v232
              $region90: #{tpu_custom_call.1} parent=84 // loop_footer
                %s227 = sadd.s32 1, %s223
              $region91: #{tpu_custom_call.1} parent=84 // loop_footer_branch
                %222 = sbr.rel target = $region87
              $region92: #{tpu_custom_call.1} parent=84 // loop_exit
                _
            $region85: #{tpu_custom_call.1} parent=69 // pred_fallthru
              _
            %p234 = pneg %p218
            // Predicated region
            $region93: #{tpu_custom_call.1} parent=69 // pred_check
              _
            $region94: #{tpu_custom_call.1} parent=69 // pred_check_branch
              %236 = sbr.rel (%p218) target = $region96
            $region95: #{tpu_custom_call.1} parent=69 // pred_region
              %s237 = sand.u32 16, 7
            $region96: #{tpu_custom_call.1} parent=69 // pred_fallthru
              _
          $region70: #{tpu_custom_call.1} parent=31 // pred_fallthru
            _
          // Predicated region
          $region71: #{tpu_custom_call.1} parent=31 // pred_check
            %p203 = pneg %p199
          $region72: #{tpu_custom_call.1} parent=31 // pred_check_branch
            %205 = sbr.rel (%p203) target = $region74
          $region73: #{tpu_custom_call.1} parent=31 // pred_region
            %s206 = sshllo.u32 0, 16
            loop: start=0, step=1, limit=1
            $region75: #{tpu_custom_call.1} parent=73 // loop_pre_header
              _
            $region76: #{tpu_custom_call.1} parent=73 // loop_header
              %s208 = sphi 0, %s212
              %p209 = scmp.ge.s32.totalorder %s208, 1
              %s213 = sphi %s1, %s1
              %s214 = sphi [#allocation3], [#allocation3]
            $region77: #{tpu_custom_call.1} parent=73 // loop_header_branch
              %211 = sbr.rel (%p209) target = $region81
            $region78: #{tpu_custom_call.1} parent=73 // loop_body
              %v215 = vld [vmem:[%s213] sm:%s206]
              %216 = vst [vmem:[%s214] sm:%s206] %v215
            $region79: #{tpu_custom_call.1} parent=73 // loop_footer
              %s212 = sadd.s32 1, %s208
            $region80: #{tpu_custom_call.1} parent=73 // loop_footer_branch
              %207 = sbr.rel target = $region76
            $region81: #{tpu_custom_call.1} parent=73 // loop_exit
              _
          $region74: #{tpu_custom_call.1} parent=31 // pred_fallthru
            _
          // Predicated region
          $region97: #{tpu_custom_call.1} parent=31 // pred_check
            _
          $region98: #{tpu_custom_call.1} parent=31 // pred_check_branch
            %240 = sbr.rel (0) target = $region100
          $region99: #{tpu_custom_call.1} parent=31 // pred_region
            %241 = vsyncadd %s197, 256
          $region100: #{tpu_custom_call.1} parent=31 // pred_fallthru
            _
          %s242 = smul.u32 16, 1
          %s243 = sshll.u32 %s242, 4
          %244 = dma.done [#allocation4], %s243
          %s245 = sshll.u32 %s242, 4
          %246 = dma.done %s197, %s245
          %vm247 = vcmask 130048
          %248 = vst.msk [vmem:[#allocation5] sm:$0xff] %vm247, 0.0
          %249 = vst.msk [vmem:[#allocation5 + $0x8] sm:$0xff] %vm247, 0.0
        $region32: #{tpu_custom_call.1} parent=27 // pred_fallthru
          _
        %v250 = vld [vmem:[#allocation2] sm:$0xff]
        %v251 = vld [vmem:[#allocation2 + $0x8] sm:$0xff]
        %v252 = vld [vmem:[#allocation3] sm:$0xff]
        %v253 = vld [vmem:[#allocation3 + $0x8] sm:$0xff]
        %v254 = vld [vmem:[%s143] sm:$0xff]
        %vm255 = vcmask 64512
        %v257 = vsel %vm255, %v250, 0
        %v260 = vsel %vm255, %v251, 0
        %262 = vmatprep.subr.mxu0 0.0
        %263 = vmatpush1.msra.mxu0 %v254
        %264 = vmatprep.subr.mxu0 0.0
        %265 = vmatpush1.msra.mxu0 0.0
        %266 = vmatprep.subr.mxu0 0.0
        %267 = vmatpush1.msra.mxu0 0.0
        %268 = vmatprep.subr.mxu0 0.0
        %269 = vmatpush1.msra.mxu0 0.0
        %270 = vmatprep.subr.mxu0 0.0
        %271 = vmatpush1.msra.mxu0 0.0
        %272 = vmatprep.subr.mxu0 0.0
        %273 = vmatpush1.msra.mxu0 0.0
        %274 = vmatprep.subr.mxu0 0.0
        %275 = vmatpush1.msra.mxu0 0.0
        %276 = vmatprep.subr.mxu0 0.0
        %277 = vmatpush1.msra.mxu0 0.0
        %278 = vmatprep.subr.mxu0 0.0
        %279 = vmatpush1.msra.mxu0 0.0
        %280 = vmatprep.subr.mxu0 0.0
        %281 = vmatpush1.msra.mxu0 0.0
        %282 = vmatprep.subr.mxu0 0.0
        %283 = vmatpush1.msra.mxu0 0.0
        %284 = vmatprep.subr.mxu0 0.0
        %285 = vmatpush1.msra.mxu0 0.0
        %286 = vmatprep.subr.mxu0 0.0
        %287 = vmatpush1.msra.mxu0 0.0
        %288 = vmatprep.subr.mxu0 0.0
        %289 = vmatpush1.msra.mxu0 0.0
        %290 = vmatprep.subr.mxu0 0.0
        %291 = vmatpush1.msra.mxu0 0.0
        %292 = vmatprep.subr.mxu0 0.0
        %293 = vmatpush1.msra.mxu0 0.0
        %294 = vmatprep.subr.mxu0 0.0
        %295 = vmatpush1.msra.mxu0 0.0
        %296 = vmatprep.subr.mxu0 0.0
        %297 = vmatpush1.msra.mxu0 0.0
        %298 = vmatprep.subr.mxu0 0.0
        %299 = vmatpush1.msra.mxu0 0.0
        %300 = vmatprep.subr.mxu0 0.0
        %301 = vmatpush1.msra.mxu0 0.0
        %302 = vmatprep.subr.mxu0 0.0
        %303 = vmatpush1.msra.mxu0 0.0
        %304 = vmatprep.subr.mxu0 0.0
        %305 = vmatpush1.msra.mxu0 0.0
        %306 = vmatprep.subr.mxu0 0.0
        %307 = vmatpush1.msra.mxu0 0.0
        %308 = vmatprep.subr.mxu0 0.0
        %309 = vmatpush1.msra.mxu0 0.0
        %310 = vmatprep.subr.mxu0 0.0
        %311 = vmatpush1.msra.mxu0 0.0
        %312 = vmatprep.subr.mxu0 0.0
        %313 = vmatpush1.msra.mxu0 0.0
        %314 = vmatprep.subr.mxu0 0.0
        %315 = vmatpush1.msra.mxu0 0.0
        %316 = vmatprep.subr.mxu0 0.0
        %317 = vmatpush1.msra.mxu0 0.0
        %318 = vmatprep.subr.mxu0 0.0
        %319 = vmatpush1.msra.mxu0 0.0
        %320 = vmatprep.subr.mxu0 0.0
        %321 = vmatpush1.msra.mxu0 0.0
        %322 = vmatprep.subr.mxu0 0.0
        %323 = vmatpush1.msra.mxu0 0.0
        %324 = vmatprep.subr.mxu0 0.0
        %325 = vmatpush1.msra.mxu0 0.0
        %326 = vmatprep.mubr.f32.mxu0 0.0
        %327 = vmatmul.mubr.f32.gmra.mrb[0].mxu0 %v257
        %v328 = vpop.f32.mrb[0].mxu0
        %v329 = vadd.f32 0.0, %v328
        %v330 = vpop.f32.mrb[0].mxu0
        %331 = vmatprep.mubr.f32.mxu0 0.0
        %332 = vmatmul.mubr.f32.gmra.mrb[0].mxu0 %v260
        %v333 = vpop.f32.mrb[0].mxu0
        %v334 = vadd.f32 0.0, %v333
        %v335 = vpop.f32.mrb[0].mxu0
        %336 = vdwg.mxu0
        %vm337 = vcmask 130048
        %v339 = vsel %vm337, %v252, 0
        %v342 = vsel %vm337, %v253, 0
        %344 = vmatprep.subr.mxu0 0.0
        %345 = vmatpush1.msra.mxu0 %v329
        %346 = vmatprep.subr.mxu0 0.0
        %347 = vmatpush1.msra.mxu0 %v334
        %348 = vmatprep.subr.mxu0 0.0
        %349 = vmatpush1.msra.mxu0 0.0
        %350 = vmatprep.subr.mxu0 0.0
        %351 = vmatpush1.msra.mxu0 0.0
        %352 = vmatprep.subr.mxu0 0.0
        %353 = vmatpush1.msra.mxu0 0.0
        %354 = vmatprep.subr.mxu0 0.0
        %355 = vmatpush1.msra.mxu0 0.0
        %356 = vmatprep.subr.mxu0 0.0
        %357 = vmatpush1.msra.mxu0 0.0
        %358 = vmatprep.subr.mxu0 0.0
        %359 = vmatpush1.msra.mxu0 0.0
        %360 = vmatprep.subr.mxu0 0.0
        %361 = vmatpush1.msra.mxu0 0.0
        %362 = vmatprep.subr.mxu0 0.0
        %363 = vmatpush1.msra.mxu0 0.0
        %364 = vmatprep.subr.mxu0 0.0
        %365 = vmatpush1.msra.mxu0 0.0
        %366 = vmatprep.subr.mxu0 0.0
        %367 = vmatpush1.msra.mxu0 0.0
        %368 = vmatprep.subr.mxu0 0.0
        %369 = vmatpush1.msra.mxu0 0.0
        %370 = vmatprep.subr.mxu0 0.0
        %371 = vmatpush1.msra.mxu0 0.0
        %372 = vmatprep.subr.mxu0 0.0
        %373 = vmatpush1.msra.mxu0 0.0
        %374 = vmatprep.subr.mxu0 0.0
        %375 = vmatpush1.msra.mxu0 0.0
        %376 = vmatprep.subr.mxu0 0.0
        %377 = vmatpush1.msra.mxu0 0.0
        %378 = vmatprep.subr.mxu0 0.0
        %379 = vmatpush1.msra.mxu0 0.0
        %380 = vmatprep.subr.mxu0 0.0
        %381 = vmatpush1.msra.mxu0 0.0
        %382 = vmatprep.subr.mxu0 0.0
        %383 = vmatpush1.msra.mxu0 0.0
        %384 = vmatprep.subr.mxu0 0.0
        %385 = vmatpush1.msra.mxu0 0.0
        %386 = vmatprep.subr.mxu0 0.0
        %387 = vmatpush1.msra.mxu0 0.0
        %388 = vmatprep.subr.mxu0 0.0
        %389 = vmatpush1.msra.mxu0 0.0
        %390 = vmatprep.subr.mxu0 0.0
        %391 = vmatpush1.msra.mxu0 0.0
        %392 = vmatprep.subr.mxu0 0.0
        %393 = vmatpush1.msra.mxu0 0.0
        %394 = vmatprep.subr.mxu0 0.0
        %395 = vmatpush1.msra.mxu0 0.0
        %396 = vmatprep.subr.mxu0 0.0
        %397 = vmatpush1.msra.mxu0 0.0
        %398 = vmatprep.subr.mxu0 0.0
        %399 = vmatpush1.msra.mxu0 0.0
        %400 = vmatprep.subr.mxu0 0.0
        %401 = vmatpush1.msra.mxu0 0.0
        %402 = vmatprep.subr.mxu0 0.0
        %403 = vmatpush1.msra.mxu0 0.0
        %404 = vmatprep.subr.mxu0 0.0
        %405 = vmatpush1.msra.mxu0 0.0
        %406 = vmatprep.subr.mxu0 0.0
        %407 = vmatpush1.msra.mxu0 0.0
        %408 = vmatprep.mubr.f32.mxu0 0.0
        %409 = vmatmul.mubr.f32.gmra.mrb[0].mxu0 %v339
        %v410 = vpop.f32.mrb[0].mxu0
        %v411 = vadd.f32 0.0, %v410
        %v412 = vpop.f32.mrb[0].mxu0
        %413 = vmatprep.mubr.f32.mxu0 0.0
        %414 = vmatmul.mubr.f32.gmra.mrb[0].mxu0 %v342
        %v415 = vpop.f32.mrb[0].mxu0
        %v416 = vadd.f32 0.0, %v415
        %v417 = vpop.f32.mrb[0].mxu0
        %418 = vdwg.mxu0
        %v419 = vmax.f32 %v411, 0.0
        %v420 = vmax.f32 %v416, 0.0
        %v421 = vld [vmem:[%s148] sm:$0xff]
        %v422 = vld [vmem:[%s148 + $0x8] sm:$0xff]
        %v423 = vld [vmem:[%s148 + $0x10] sm:$0xff]
        %v424 = vld [vmem:[%s148 + $0x18] sm:$0xff]
        %v425 = vld [vmem:[%s148 + $0x20] sm:$0xff]
        %v426 = vld [vmem:[%s148 + $0x28] sm:$0xff]
        %v427 = vld [vmem:[%s148 + $0x30] sm:$0xff]
        %v428 = vld [vmem:[%s148 + $0x38] sm:$0xff]
        %vm429 = vcmask 523264
        %v431 = vsel %vm429, %v419, 0
        %v434 = vsel %vm429, %v420, 0
        %436 = vmatprep.subr.mxu0 0.0
        %437 = vmatpush1.msra.mxu0 %v421
        %438 = vmatprep.subr.mxu0 0.0
        %439 = vmatpush1.msra.mxu0 %v422
        %440 = vmatprep.subr.mxu0 0.0
        %441 = vmatpush1.msra.mxu0 %v423
        %442 = vmatprep.subr.mxu0 0.0
        %443 = vmatpush1.msra.mxu0 %v424
        %444 = vmatprep.subr.mxu0 0.0
        %445 = vmatpush1.msra.mxu0 %v425
        %446 = vmatprep.subr.mxu0 0.0
        %447 = vmatpush1.msra.mxu0 %v426
        %448 = vmatprep.subr.mxu0 0.0
        %449 = vmatpush1.msra.mxu0 %v427
        %450 = vmatprep.subr.mxu0 0.0
        %451 = vmatpush1.msra.mxu0 %v428
        %452 = vmatprep.subr.mxu0 0.0
        %453 = vmatpush1.msra.mxu0 0.0
        %454 = vmatprep.subr.mxu0 0.0
        %455 = vmatpush1.msra.mxu0 0.0
        %456 = vmatprep.subr.mxu0 0.0
        %457 = vmatpush1.msra.mxu0 0.0
        %458 = vmatprep.subr.mxu0 0.0
        %459 = vmatpush1.msra.mxu0 0.0
        %460 = vmatprep.subr.mxu0 0.0
        %461 = vmatpush1.msra.mxu0 0.0
        %462 = vmatprep.subr.mxu0 0.0
        %463 = vmatpush1.msra.mxu0 0.0
        %464 = vmatprep.subr.mxu0 0.0
        %465 = vmatpush1.msra.mxu0 0.0
        %466 = vmatprep.subr.mxu0 0.0
        %467 = vmatpush1.msra.mxu0 0.0
        %468 = vmatprep.subr.mxu0 0.0
        %469 = vmatpush1.msra.mxu0 0.0
        %470 = vmatprep.subr.mxu0 0.0
        %471 = vmatpush1.msra.mxu0 0.0
        %472 = vmatprep.subr.mxu0 0.0
        %473 = vmatpush1.msra.mxu0 0.0
        %474 = vmatprep.subr.mxu0 0.0
        %475 = vmatpush1.msra.mxu0 0.0
        %476 = vmatprep.subr.mxu0 0.0
        %477 = vmatpush1.msra.mxu0 0.0
        %478 = vmatprep.subr.mxu0 0.0
        %479 = vmatpush1.msra.mxu0 0.0
        %480 = vmatprep.subr.mxu0 0.0
        %481 = vmatpush1.msra.mxu0 0.0
        %482 = vmatprep.subr.mxu0 0.0
        %483 = vmatpush1.msra.mxu0 0.0
        %484 = vmatprep.subr.mxu0 0.0
        %485 = vmatpush1.msra.mxu0 0.0
        %486 = vmatprep.subr.mxu0 0.0
        %487 = vmatpush1.msra.mxu0 0.0
        %488 = vmatprep.subr.mxu0 0.0
        %489 = vmatpush1.msra.mxu0 0.0
        %490 = vmatprep.subr.mxu0 0.0
        %491 = vmatpush1.msra.mxu0 0.0
        %492 = vmatprep.subr.mxu0 0.0
        %493 = vmatpush1.msra.mxu0 0.0
        %494 = vmatprep.subr.mxu0 0.0
        %495 = vmatpush1.msra.mxu0 0.0
        %496 = vmatprep.subr.mxu0 0.0
        %497 = vmatpush1.msra.mxu0 0.0
        %498 = vmatprep.subr.mxu0 0.0
        %499 = vmatpush1.msra.mxu0 0.0
        %500 = vmatprep.mubr.f32.mxu0 0.0
        %501 = vmatmul.mubr.f32.gmra.mrb[0].mxu0 %v431
        %v502 = vpop.f32.mrb[0].mxu0
        %v503 = vadd.f32 0.0, %v502
        %v504 = vpop.f32.mrb[0].mxu0
        %505 = vmatprep.mubr.f32.mxu0 0.0
        %506 = vmatmul.mubr.f32.gmra.mrb[0].mxu0 %v434
        %v507 = vpop.f32.mrb[0].mxu0
        %v508 = vadd.f32 0.0, %v507
        %v509 = vpop.f32.mrb[0].mxu0
        %510 = vdwg.mxu0
        %511 = vmatprep.subr.mxu0 0.0
        %512 = vmatpush1.msra.mxu0 %v503
        %513 = vmatprep.subr.mxu0 0.0
        %514 = vmatpush1.msra.mxu0 %v508
        %515 = vmatprep.subr.mxu0 0.0
        %516 = vmatpush1.msra.mxu0 0.0
        %517 = vmatprep.subr.mxu0 0.0
        %518 = vmatpush1.msra.mxu0 0.0
        %519 = vmatprep.subr.mxu0 0.0
        %520 = vmatpush1.msra.mxu0 0.0
        %521 = vmatprep.subr.mxu0 0.0
        %522 = vmatpush1.msra.mxu0 0.0
        %523 = vmatprep.subr.mxu0 0.0
        %524 = vmatpush1.msra.mxu0 0.0
        %525 = vmatprep.subr.mxu0 0.0
        %526 = vmatpush1.msra.mxu0 0.0
        %527 = vmatprep.subr.mxu0 0.0
        %528 = vmatpush1.msra.mxu0 0.0
        %529 = vmatprep.subr.mxu0 0.0
        %530 = vmatpush1.msra.mxu0 0.0
        %531 = vmatprep.subr.mxu0 0.0
        %532 = vmatpush1.msra.mxu0 0.0
        %533 = vmatprep.subr.mxu0 0.0
        %534 = vmatpush1.msra.mxu0 0.0
        %535 = vmatprep.subr.mxu0 0.0
        %536 = vmatpush1.msra.mxu0 0.0
        %537 = vmatprep.subr.mxu0 0.0
        %538 = vmatpush1.msra.mxu0 0.0
        %539 = vmatprep.subr.mxu0 0.0
        %540 = vmatpush1.msra.mxu0 0.0
        %541 = vmatprep.subr.mxu0 0.0
        %542 = vmatpush1.msra.mxu0 0.0
        %543 = vmatprep.subr.mxu0 0.0
        %544 = vmatpush1.msra.mxu0 0.0
        %545 = vmatprep.subr.mxu0 0.0
        %546 = vmatpush1.msra.mxu0 0.0
        %547 = vmatprep.subr.mxu0 0.0
        %548 = vmatpush1.msra.mxu0 0.0
        %549 = vmatprep.subr.mxu0 0.0
        %550 = vmatpush1.msra.mxu0 0.0
        %551 = vmatprep.subr.mxu0 0.0
        %552 = vmatpush1.msra.mxu0 0.0
        %553 = vmatprep.subr.mxu0 0.0
        %554 = vmatpush1.msra.mxu0 0.0
        %555 = vmatprep.subr.mxu0 0.0
        %556 = vmatpush1.msra.mxu0 0.0
        %557 = vmatprep.subr.mxu0 0.0
        %558 = vmatpush1.msra.mxu0 0.0
        %559 = vmatprep.subr.mxu0 0.0
        %560 = vmatpush1.msra.mxu0 0.0
        %561 = vmatprep.subr.mxu0 0.0
        %562 = vmatpush1.msra.mxu0 0.0
        %563 = vmatprep.subr.mxu0 0.0
        %564 = vmatpush1.msra.mxu0 0.0
        %565 = vmatprep.subr.mxu0 0.0
        %566 = vmatpush1.msra.mxu0 0.0
        %567 = vmatprep.subr.mxu0 0.0
        %568 = vmatpush1.msra.mxu0 0.0
        %569 = vmatprep.subr.mxu0 0.0
        %570 = vmatpush1.msra.mxu0 0.0
        %571 = vmatprep.subr.mxu0 0.0
        %572 = vmatpush1.msra.mxu0 0.0
        %573 = vmatprep.subr.mxu0 0.0
        %574 = vmatpush1.msra.mxu0 0.0
        %575 = vmatprep.mubr.f32.mxu0 0.0
        %576 = vmatmul.mubr.f32.gmra.mrb[0].mxu0 %v339
        %v577 = vpop.f32.mrb[0].mxu0
        %v578 = vadd.f32 0.0, %v577
        %v579 = vpop.f32.mrb[0].mxu0
        %580 = vmatprep.mubr.f32.mxu0 0.0
        %581 = vmatmul.mubr.f32.gmra.mrb[0].mxu0 %v342
        %v582 = vpop.f32.mrb[0].mxu0
        %v583 = vadd.f32 0.0, %v582
        %v584 = vpop.f32.mrb[0].mxu0
        %585 = vdwg.mxu0
        %v586 = vmax.f32 %v578, 0.0
        %v587 = vmax.f32 %v583, 0.0
        %vm588 = vcmask 261120
        %v589 = vsel %vm588, %v586, 0.0
        %v590 = vsel %vm588, %v587, 0.0
        %v591 = vadd.f32 %v589, %v590
        %v592 = vrot.slane %v591, 4
        %v593 = vadd.f32 %v591, %v592
        %v594 = vrot.slane %v593, 2
        %v595 = vadd.f32 %v593, %v594
        %v596 = vrot.slane %v595, 1
        %v597 = vadd.f32 %v595, %v596
        %v598 = vrcp.pop 16.0
        %v599 = vmul.f32 %v597, %v598
        %v600 = vsub.f32 %v586, %v599
        %v601 = vsub.f32 %v587, %v599
        %604 = vrot.lane.b32.xlu0 %v600, 112
        %v605 = vpop.permute.xlu0 %604
        %606 = vrot.lane.b32.xlu0 %v601, 112
        %v607 = vpop.permute.xlu0 %606
        %610 = vrot.lane.b32.xlu0 %v600, 16
        %v611 = vpop.permute.xlu0 %610
        %612 = vrot.lane.b32.xlu0 %v601, 16
        %v613 = vpop.permute.xlu0 %612
        %v616 = vsel %vm337, %v605, %v611
        %v617 = vsel %vm337, %v607, %v613
        %v618 = vld [vmem:[#allocation5] sm:$0xff]
        %v619 = vld [vmem:[#allocation5 + $0x8] sm:$0xff]
        %v620 = vsel %vm588, %v600, 0
        %v622 = vsel %vm588, %v601, 0
        %v625 = vsel %vm588, %v616, 0
        %v628 = vsel %vm588, %v617, 0
        %630 = vmatprep.subr.mxu0 0.0
        %631 = vmatpush1.xpose.msra.mxu0 %v625
        %632 = vmatprep.subr.mxu0 0.0
        %633 = vmatpush1.xpose.msra.mxu0 %v628
        %634 = vmatprep.subr.mxu0 0.0
        %635 = vmatpush1.xpose.msra.mxu0 0.0
        %636 = vmatprep.subr.mxu0 0.0
        %637 = vmatpush1.xpose.msra.mxu0 0.0
        %638 = vmatprep.subr.mxu0 0.0
        %639 = vmatpush1.xpose.msra.mxu0 0.0
        %640 = vmatprep.subr.mxu0 0.0
        %641 = vmatpush1.xpose.msra.mxu0 0.0
        %642 = vmatprep.subr.mxu0 0.0
        %643 = vmatpush1.xpose.msra.mxu0 0.0
        %644 = vmatprep.subr.mxu0 0.0
        %645 = vmatpush1.xpose.msra.mxu0 0.0
        %646 = vmatprep.subr.mxu0 0.0
        %647 = vmatpush1.xpose.msra.mxu0 0.0
        %648 = vmatprep.subr.mxu0 0.0
        %649 = vmatpush1.xpose.msra.mxu0 0.0
        %650 = vmatprep.subr.mxu0 0.0
        %651 = vmatpush1.xpose.msra.mxu0 0.0
        %652 = vmatprep.subr.mxu0 0.0
        %653 = vmatpush1.xpose.msra.mxu0 0.0
        %654 = vmatprep.subr.mxu0 0.0
        %655 = vmatpush1.xpose.msra.mxu0 0.0
        %656 = vmatprep.subr.mxu0 0.0
        %657 = vmatpush1.xpose.msra.mxu0 0.0
        %658 = vmatprep.subr.mxu0 0.0
        %659 = vmatpush1.xpose.msra.mxu0 0.0
        %660 = vmatprep.subr.mxu0 0.0
        %661 = vmatpush1.xpose.msra.mxu0 0.0
        %662 = vmatprep.subr.mxu0 0.0
        %663 = vmatpush1.xpose.msra.mxu0 0.0
        %664 = vmatprep.subr.mxu0 0.0
        %665 = vmatpush1.xpose.msra.mxu0 0.0
        %666 = vmatprep.subr.mxu0 0.0
        %667 = vmatpush1.xpose.msra.mxu0 0.0
        %668 = vmatprep.subr.mxu0 0.0
        %669 = vmatpush1.xpose.msra.mxu0 0.0
        %670 = vmatprep.subr.mxu0 0.0
        %671 = vmatpush1.xpose.msra.mxu0 0.0
        %672 = vmatprep.subr.mxu0 0.0
        %673 = vmatpush1.xpose.msra.mxu0 0.0
        %674 = vmatprep.subr.mxu0 0.0
        %675 = vmatpush1.xpose.msra.mxu0 0.0
        %676 = vmatprep.subr.mxu0 0.0
        %677 = vmatpush1.xpose.msra.mxu0 0.0
        %678 = vmatprep.subr.mxu0 0.0
        %679 = vmatpush1.xpose.msra.mxu0 0.0
        %680 = vmatprep.subr.mxu0 0.0
        %681 = vmatpush1.xpose.msra.mxu0 0.0
        %682 = vmatprep.subr.mxu0 0.0
        %683 = vmatpush1.xpose.msra.mxu0 0.0
        %684 = vmatprep.subr.mxu0 0.0
        %685 = vmatpush1.xpose.msra.mxu0 0.0
        %686 = vmatprep.subr.mxu0 0.0
        %687 = vmatpush1.xpose.msra.mxu0 0.0
        %688 = vmatprep.subr.mxu0 0.0
        %689 = vmatpush1.xpose.msra.mxu0 0.0
        %690 = vmatprep.subr.mxu0 0.0
        %691 = vmatpush1.xpose.msra.mxu0 0.0
        %692 = vmatprep.subr.mxu0 0.0
        %693 = vmatpush1.xpose.msra.mxu0 0.0
        %694 = vmatprep.mubr.f32.mxu0 0.0
        %695 = vmatmul.mubr.f32.gmra.mrb[0].mxu0 %v620
        %v696 = vpop.f32.mrb[0].mxu0
        %v697 = vadd.f32 0.0, %v696
        %v698 = vpop.f32.mrb[0].mxu0
        %699 = vmatprep.mubr.f32.mxu0 0.0
        %700 = vmatmul.mubr.f32.gmra.mrb[0].mxu0 %v622
        %v701 = vpop.f32.mrb[0].mxu0
        %v702 = vadd.f32 0.0, %v701
        %v703 = vpop.f32.mrb[0].mxu0
        %704 = vdwg.mxu0
        %v705 = vadd.f32 %v618, %v697
        %v706 = vadd.f32 %v619, %v702
        %707 = vst.msk [vmem:[#allocation5] sm:$0xff] %vm337, %v705
        %708 = vst.msk [vmem:[#allocation5 + $0x8] sm:$0xff] %vm337, %v706
        %p709 = scmp.eq.s32.totalorder %s16, 1
        // Predicated region
        $region101: #{tpu_custom_call.1} parent=27 // pred_check
          %p710 = pneg %p709
        $region102: #{tpu_custom_call.1} parent=27 // pred_check_branch
          %712 = sbr.rel (%p710) target = $region104
        $region103: #{tpu_custom_call.1} parent=27 // pred_region
          %v713 = vld [vmem:[#allocation5] sm:$0xff]
          %v714 = vld [vmem:[#allocation5 + $0x8] sm:$0xff]
          %v715 = vxor.u32 %v713, 2147483648
          %v716 = vxor.u32 %v714, 2147483648
          %v717 = vmul.f32 %v715, 1.442695
          %v718 = vpow.pop %v717
          %v719 = vmul.f32 %v716, 1.442695
          %v720 = vpow.pop %v719
          %v721 = vadd.f32 %v718, 1.0
          %v722 = vadd.f32 %v720, 1.0
          %v723 = vrcp.pop %v721
          %v724 = vmul.f32 1.0, %v723
          %v725 = vrcp.pop %v722
          %v726 = vmul.f32 1.0, %v725
          %727 = vst.msk [vmem:[#allocation5] sm:$0xff] %vm337, %v724
          %728 = vst.msk [vmem:[#allocation5 + $0x8] sm:$0xff] %vm337, %v726
        $region104: #{tpu_custom_call.1} parent=27 // pred_fallthru
          _
        // Predicated region
        $region105: #{tpu_custom_call.1} parent=27 // pred_check
          %p729 = pneg %p81
        $region106: #{tpu_custom_call.1} parent=27 // pred_check_branch
          %731 = sbr.rel (%p729) target = $region108
        $region107: #{tpu_custom_call.1} parent=27 // pred_region
          %s733 = ssub.s32 256, 256
          %734 = vsyncadd [#allocation6], %s733
          %s735 = sshll.u32 [#allocation5], 4
          %s736 = int_to_ptr.vmem [resolvable:$true] %s735
          %741 = dma.vmem_to_hbm [thread:$0]  %s736, 256, %s4, [#allocation6], 128, 128, 8
        $region108: #{tpu_custom_call.1} parent=27 // pred_fallthru
          _
        // Predicated region
        $region109: #{tpu_custom_call.1} parent=27 // pred_check
          %p742 = pneg %p81
        $region110: #{tpu_custom_call.1} parent=27 // pred_check_branch
          %744 = sbr.rel (%p742) target = $region112
        $region111: #{tpu_custom_call.1} parent=27 // pred_region
          %745 = dma.done [#allocation6], 256
        $region112: #{tpu_custom_call.1} parent=27 // pred_fallthru
          _
      $region28: #{tpu_custom_call.1} parent=5 // pred_fallthru
        _
      %p746 = scmp.le.s32.totalorder 2, %s11
      // Predicated region
      $region113: #{tpu_custom_call.1} parent=5 // pred_check
        %p747 = pneg %p746
      $region114: #{tpu_custom_call.1} parent=5 // pred_check_branch
        %749 = sbr.rel (%p747) target = $region116
      $region115: #{tpu_custom_call.1} parent=5 // pred_region
        %s750 = ssub.s32 %s11, 2
      $region116: #{tpu_custom_call.1} parent=5 // pred_fallthru
        _
    $region6: #{tpu_custom_call.1} parent=1 // loop_footer
      %s15 = sadd.s32 1, %s11
    $region7: #{tpu_custom_call.1} parent=1 // loop_footer_branch
      %10 = sbr.rel target = $region3
    $region8: #{tpu_custom_call.1} parent=1 // loop_exit
      _
    %751 = vsyncpa [#allocation6], 1
    %s752 = scalar_lea.sflag [#allocation6], 1
    %753 = vsyncpa %s752, 1
  %754 = vsyncmov [#allocation4]
  %s755 = vpop.sfrf %754
  %p756 = scmp.eq.s32.totalorder %s755, 0
  %p757 = pneg %p756
  %759 = shalt.err (%p757)
  %s760 = scalar_lea.sflag [#allocation4], 1
  %761 = vsyncmov %s760
  %s762 = vpop.sfrf %761
  %p763 = scmp.eq.s32.totalorder %s762, 0
  %p764 = pneg %p763
  %766 = shalt.err (%p764)

</llo_original>
